<compile_context>
chip_gen: v6e
topology: v6e:2x2x1
jax: 0.10.0
libtpu: 0.0.40
codegen_flags: <defaults>
</compile_context>

<pallas_src>
import numpy as np
import jax
import jax.numpy as jnp
from jax.experimental import pallas as pl
from jax.experimental.pallas import tpu as pltpu

NUM_QUBITS = 7            # D = 2**7 = 128  (matches the TPU lane width)
NUM_OUTPUTS = 8
DIM = 1 << NUM_QUBITS


# ----------------------------------------------------------------------------
# Parameter / gate construction (plain numpy glue, done once at "init")
# ----------------------------------------------------------------------------
def _ry(theta):
    c, s = np.cos(theta / 2.0), np.sin(theta / 2.0)
    return np.array([[c, -s], [s, c]], dtype=np.float64)


def _ry_layer(n, thetas):
    # Qiskit statevector convention: |q_{n-1}> (x) ... (x) |q_0>
    m = np.array([[1.0]], dtype=np.float64)
    for q in range(n - 1, -1, -1):
        m = np.kron(m, _ry(thetas[q]))
    return m


def _cx_matrix(n, control, target):
    d = 1 << n
    idx = np.arange(d)
    flipped = np.where(((idx >> control) & 1) == 1, idx ^ (1 << target), idx)
    p = np.zeros((d, d), dtype=np.float64)
    p[flipped, idx] = 1.0
    return p


def build_real_amplitudes_unitary(n, reps, thetas):
    """Dense unitary of RealAmplitudes(n, reps) with reverse_linear entanglement."""
    d = 1 << n
    # Entanglement layer: CX(n-2,n-1), CX(n-3,n-2), ..., CX(0,1) applied in order.
    ent = np.eye(d, dtype=np.float64)
    for c in range(n - 2, -1, -1):
        ent = _cx_matrix(n, c, c + 1) @ ent
    u = _ry_layer(n, thetas[0:n])
    for r in range(1, reps + 1):
        u = ent @ u
        u = _ry_layer(n, thetas[r * n:(r + 1) * n]) @ u
    return u  # float64 (d, d)


# ----------------------------------------------------------------------------
# Pure-numpy reference of the RX encoding (used only for the sanity check)
# ----------------------------------------------------------------------------
def encode_rx_state_ref(x_row):
    """RX(x_q) on |0...0>: kron_{q=n-1..0} [cos(x_q/2), -i sin(x_q/2)] (complex128)."""
    n = x_row.shape[0]
    vecs = [np.array([np.cos(x_row[q] / 2.0), -1j * np.sin(x_row[q] / 2.0)],
                     dtype=np.complex128) for q in range(n)]
    psi = vecs[n - 1]
    for q in range(n - 2, -1, -1):
        psi = np.kron(psi, vecs[q])
    return psi  # (D,)


# ----------------------------------------------------------------------------
# Pallas kernel: fused RX-encode -> ansatz matmul -> |psi|^2 -> rotate-fold mod-K
# ----------------------------------------------------------------------------
def qnn_kernel(cs_ref, ut_ref, out_ref):
    # cs_ref:  (2, NUM_QUBITS) SMEM -- row 0 = cos(x_q/2), row 1 = sin(x_q/2)
    # ut_ref:  (D, D) VMEM          -- U_ansatz^T (real ansatz unitary, transposed)
    # out_ref: (1, D) VMEM          -- lanes 0..K-1 hold the probability histogram
    idx = jax.lax.broadcasted_iota(jnp.int32, (1, DIM), 1)   # basis index along lanes

    # Magnitude prod_q (cos or sin) and popcount of the basis index.
    mag = jnp.ones((1, DIM), dtype=jnp.float32)
    pc = jnp.zeros((1, DIM), dtype=jnp.int32)
    for q in range(NUM_QUBITS):
        bit = (idx >> q) & 1
        c = cs_ref[0, q]
        s = cs_ref[1, q]
        mag = mag * jnp.where(bit != 0, s, c)
        pc = pc + bit

    # Global phase (-i)^popcount via bit arithmetic (no selects):
    #   pc&3 = 0 -> +1 ; 1 -> -i ; 2 -> -1 ; 3 -> +i
    b0 = pc & 1
    b1 = pc & 2
    re_ph = ((1 - b0) * (1 - b1)).astype(jnp.float32)   # +1, 0, -1, 0
    im_ph = (b0 * (b1 - 1)).astype(jnp.float32)         #  0,-1,  0,+1

    # (2, D) rows = [Re(psi); Im(psi)] of the RX-encoded state.
    psi = jnp.concatenate([mag * re_ph, mag * im_ph], axis=0)

    # Real ansatz acts independently on the real/imag rows: psi_out = psi @ U^T.
    psi_out = jnp.dot(psi, ut_ref[...],
                      preferred_element_type=jnp.float32,
                      precision=jax.lax.Precision.HIGHEST)       # (2, D)

    # Lane-dense |psi|^2 across the full 128-lane vreg.
    probs = (psi_out[0:1, :] * psi_out[0:1, :]
             + psi_out[1:2, :] * psi_out[1:2, :])                # (1, D)

    # Modular histogram via XLU lane-rotate fold (no second MXU pass).
    # After each fold the row becomes periodic with half the period, so a
    # positive rotate is equivalent to the negative one; after all 4 folds
    # every lane j holds sum_{i : i % 8 == j % 8} probs[i].
    for s in (64, 32, 16, 8):
        probs = probs + pltpu.roll(probs, shift=s, axis=1)

    out_ref[...] = probs


@jax.jit
def quantum_neural_net_forward(x, u_t):
    """x: (batch, num_qubits); only x[0] is consumed, matching the PyTorch forward."""
    cs = jnp.stack([jnp.cos(x[0] * 0.5), jnp.sin(x[0] * 0.5)],
                   axis=0).astype(jnp.float32)                  # (2, NUM_QUBITS)
    out = pl.pallas_call(
        qnn_kernel,
        out_shape=jax.ShapeDtypeStruct((1, DIM), jnp.float32),
        in_specs=[
            pl.BlockSpec(memory_space=pltpu.MemorySpace.SMEM),   # cos/sin scalars
            pl.BlockSpec(memory_space=pltpu.MemorySpace.VMEM),   # U^T (128,128)
        ],
        out_specs=pl.BlockSpec(memory_space=pltpu.MemorySpace.VMEM),
    )(cs, u_t)
    return out[0, :NUM_OUTPUTS]  # (num_outputs,)


if __name__ == "__main__":
    # Deterministic "weights": RealAmplitudes has num_qubits*(reps+1) parameters.
    rng = np.random.default_rng(0)
    thetas = rng.uniform(0.0, 2.0 * np.pi, size=NUM_QUBITS * 3)
    u64 = build_real_amplitudes_unitary(NUM_QUBITS, 2, thetas)     # (D, D) f64
    u_t = jnp.asarray(u64.T.astype(np.float32))                    # kernel: U^T

    # Deterministic example input: (batch=2, num_qubits=7); forward uses x[0].
    x = jax.random.uniform(jax.random.PRNGKey(0), (2, NUM_QUBITS),
                           dtype=jnp.float32, minval=0.0, maxval=np.pi)

    out = quantum_neural_net_forward(x, u_t)
    out = jax.block_until_ready(out)

    # Pure numpy float64 reference of the same math for a sanity check.
    x0 = np.asarray(x[0], dtype=np.float64)
    psi0 = encode_rx_state_ref(x0)                 # RX-encoded state (complex)
    psi_f = u64 @ psi0                             # ansatz applied
    probs_ref = np.abs(psi_f) ** 2
    out_ref = np.zeros(NUM_OUTPUTS, dtype=np.float64)
    for j in range(DIM):
        out_ref[j % NUM_OUTPUTS] += probs_ref[j]

    assert out.shape == (NUM_OUTPUTS,)
    assert np.allclose(np.asarray(out), out_ref, atol=1e-4)
    assert abs(float(jnp.sum(out)) - 1.0) < 1e-4   # probabilities sum to 1

    print("KERNEL_OK")
</pallas_src>

<mosaic_0001>
module attributes {stable_mosaic.version = 11 : i64} {
  func.func @qnn_kernel(%arg0: memref<2x7xf32, #tpu.memory_space<smem>>, %arg1: memref<128x128xf32, #tpu.memory_space<vmem>>, %arg2: memref<1x128xf32, #tpu.memory_space<vmem>>) attributes {dimension_semantics = [], scalar_prefetch = 0 : i64, scratch_operands = 0 : i64, tpu.core_type = #tpu.core_type<tc>} {
    %0 = tpu.iota {dimensions = array<i32: 1>} : vector<1x128xi32>
    %cst = arith.constant 1.000000e+00 : f32
    %1 = vector.broadcast %cst : f32 to vector<1x128xf32>
    %c0_i32 = arith.constant 0 : i32
    %2 = vector.broadcast %c0_i32 : i32 to vector<1x128xi32>
    %c0_i32_0 = arith.constant 0 : i32
    %3 = vector.broadcast %c0_i32_0 : i32 to vector<1x128xi32>
    %4 = arith.shrsi %0, %3 : vector<1x128xi32>
    %c1_i32 = arith.constant 1 : i32
    %5 = vector.broadcast %c1_i32 : i32 to vector<1x128xi32>
    %6 = arith.andi %4, %5 : vector<1x128xi32>
    %c0 = arith.constant 0 : index
    %c0_1 = arith.constant 0 : index
    %7 = memref.load %arg0[%c0, %c0_1] : memref<2x7xf32, #tpu.memory_space<smem>>
    %c1 = arith.constant 1 : index
    %c0_2 = arith.constant 0 : index
    %8 = memref.load %arg0[%c1, %c0_2] : memref<2x7xf32, #tpu.memory_space<smem>>
    %c0_i32_3 = arith.constant 0 : i32
    %9 = vector.broadcast %c0_i32_3 : i32 to vector<1x128xi32>
    %10 = arith.cmpi ne, %6, %9 : vector<1x128xi32>
    %11 = vector.broadcast %8 : f32 to vector<1x128xf32>
    %12 = vector.broadcast %7 : f32 to vector<1x128xf32>
    %13 = arith.select %10, %11, %12 : vector<1x128xi1>, vector<1x128xf32>
    %14 = arith.mulf %1, %13 : vector<1x128xf32>
    %15 = arith.addi %2, %6 : vector<1x128xi32>
    %c1_i32_4 = arith.constant 1 : i32
    %16 = vector.broadcast %c1_i32_4 : i32 to vector<1x128xi32>
    %17 = arith.shrsi %0, %16 : vector<1x128xi32>
    %c1_i32_5 = arith.constant 1 : i32
    %18 = vector.broadcast %c1_i32_5 : i32 to vector<1x128xi32>
    %19 = arith.andi %17, %18 : vector<1x128xi32>
    %c0_6 = arith.constant 0 : index
    %c1_7 = arith.constant 1 : index
    %20 = memref.load %arg0[%c0_6, %c1_7] : memref<2x7xf32, #tpu.memory_space<smem>>
    %c1_8 = arith.constant 1 : index
    %c1_9 = arith.constant 1 : index
    %21 = memref.load %arg0[%c1_8, %c1_9] : memref<2x7xf32, #tpu.memory_space<smem>>
    %c0_i32_10 = arith.constant 0 : i32
    %22 = vector.broadcast %c0_i32_10 : i32 to vector<1x128xi32>
    %23 = arith.cmpi ne, %19, %22 : vector<1x128xi32>
    %24 = vector.broadcast %21 : f32 to vector<1x128xf32>
    %25 = vector.broadcast %20 : f32 to vector<1x128xf32>
    %26 = arith.select %23, %24, %25 : vector<1x128xi1>, vector<1x128xf32>
    %27 = arith.mulf %14, %26 : vector<1x128xf32>
    %28 = arith.addi %15, %19 : vector<1x128xi32>
    %c2_i32 = arith.constant 2 : i32
    %29 = vector.broadcast %c2_i32 : i32 to vector<1x128xi32>
    %30 = arith.shrsi %0, %29 : vector<1x128xi32>
    %c1_i32_11 = arith.constant 1 : i32
    %31 = vector.broadcast %c1_i32_11 : i32 to vector<1x128xi32>
    %32 = arith.andi %30, %31 : vector<1x128xi32>
    %c0_12 = arith.constant 0 : index
    %c2 = arith.constant 2 : index
    %33 = memref.load %arg0[%c0_12, %c2] : memref<2x7xf32, #tpu.memory_space<smem>>
    %c1_13 = arith.constant 1 : index
    %c2_14 = arith.constant 2 : index
    %34 = memref.load %arg0[%c1_13, %c2_14] : memref<2x7xf32, #tpu.memory_space<smem>>
    %c0_i32_15 = arith.constant 0 : i32
    %35 = vector.broadcast %c0_i32_15 : i32 to vector<1x128xi32>
    %36 = arith.cmpi ne, %32, %35 : vector<1x128xi32>
    %37 = vector.broadcast %34 : f32 to vector<1x128xf32>
    %38 = vector.broadcast %33 : f32 to vector<1x128xf32>
    %39 = arith.select %36, %37, %38 : vector<1x128xi1>, vector<1x128xf32>
    %40 = arith.mulf %27, %39 : vector<1x128xf32>
    %41 = arith.addi %28, %32 : vector<1x128xi32>
    %c3_i32 = arith.constant 3 : i32
    %42 = vector.broadcast %c3_i32 : i32 to vector<1x128xi32>
    %43 = arith.shrsi %0, %42 : vector<1x128xi32>
    %c1_i32_16 = arith.constant 1 : i32
    %44 = vector.broadcast %c1_i32_16 : i32 to vector<1x128xi32>
    %45 = arith.andi %43, %44 : vector<1x128xi32>
    %c0_17 = arith.constant 0 : index
    %c3 = arith.constant 3 : index
    %46 = memref.load %arg0[%c0_17, %c3] : memref<2x7xf32, #tpu.memory_space<smem>>
    %c1_18 = arith.constant 1 : index
    %c3_19 = arith.constant 3 : index
    %47 = memref.load %arg0[%c1_18, %c3_19] : memref<2x7xf32, #tpu.memory_space<smem>>
    %c0_i32_20 = arith.constant 0 : i32
    %48 = vector.broadcast %c0_i32_20 : i32 to vector<1x128xi32>
    %49 = arith.cmpi ne, %45, %48 : vector<1x128xi32>
    %50 = vector.broadcast %47 : f32 to vector<1x128xf32>
    %51 = vector.broadcast %46 : f32 to vector<1x128xf32>
    %52 = arith.select %49, %50, %51 : vector<1x128xi1>, vector<1x128xf32>
    %53 = arith.mulf %40, %52 : vector<1x128xf32>
    %54 = arith.addi %41, %45 : vector<1x128xi32>
    %c4_i32 = arith.constant 4 : i32
    %55 = vector.broadcast %c4_i32 : i32 to vector<1x128xi32>
    %56 = arith.shrsi %0, %55 : vector<1x128xi32>
    %c1_i32_21 = arith.constant 1 : i32
    %57 = vector.broadcast %c1_i32_21 : i32 to vector<1x128xi32>
    %58 = arith.andi %56, %57 : vector<1x128xi32>
    %c0_22 = arith.constant 0 : index
    %c4 = arith.constant 4 : index
    %59 = memref.load %arg0[%c0_22, %c4] : memref<2x7xf32, #tpu.memory_space<smem>>
    %c1_23 = arith.constant 1 : index
    %c4_24 = arith.constant 4 : index
    %60 = memref.load %arg0[%c1_23, %c4_24] : memref<2x7xf32, #tpu.memory_space<smem>>
    %c0_i32_25 = arith.constant 0 : i32
    %61 = vector.broadcast %c0_i32_25 : i32 to vector<1x128xi32>
    %62 = arith.cmpi ne, %58, %61 : vector<1x128xi32>
    %63 = vector.broadcast %60 : f32 to vector<1x128xf32>
    %64 = vector.broadcast %59 : f32 to vector<1x128xf32>
    %65 = arith.select %62, %63, %64 : vector<1x128xi1>, vector<1x128xf32>
    %66 = arith.mulf %53, %65 : vector<1x128xf32>
    %67 = arith.addi %54, %58 : vector<1x128xi32>
    %c5_i32 = arith.constant 5 : i32
    %68 = vector.broadcast %c5_i32 : i32 to vector<1x128xi32>
    %69 = arith.shrsi %0, %68 : vector<1x128xi32>
    %c1_i32_26 = arith.constant 1 : i32
    %70 = vector.broadcast %c1_i32_26 : i32 to vector<1x128xi32>
    %71 = arith.andi %69, %70 : vector<1x128xi32>
    %c0_27 = arith.constant 0 : index
    %c5 = arith.constant 5 : index
    %72 = memref.load %arg0[%c0_27, %c5] : memref<2x7xf32, #tpu.memory_space<smem>>
    %c1_28 = arith.constant 1 : index
    %c5_29 = arith.constant 5 : index
    %73 = memref.load %arg0[%c1_28, %c5_29] : memref<2x7xf32, #tpu.memory_space<smem>>
    %c0_i32_30 = arith.constant 0 : i32
    %74 = vector.broadcast %c0_i32_30 : i32 to vector<1x128xi32>
    %75 = arith.cmpi ne, %71, %74 : vector<1x128xi32>
    %76 = vector.broadcast %73 : f32 to vector<1x128xf32>
    %77 = vector.broadcast %72 : f32 to vector<1x128xf32>
    %78 = arith.select %75, %76, %77 : vector<1x128xi1>, vector<1x128xf32>
    %79 = arith.mulf %66, %78 : vector<1x128xf32>
    %80 = arith.addi %67, %71 : vector<1x128xi32>
    %c6_i32 = arith.constant 6 : i32
    %81 = vector.broadcast %c6_i32 : i32 to vector<1x128xi32>
    %82 = arith.shrsi %0, %81 : vector<1x128xi32>
    %c1_i32_31 = arith.constant 1 : i32
    %83 = vector.broadcast %c1_i32_31 : i32 to vector<1x128xi32>
    %84 = arith.andi %82, %83 : vector<1x128xi32>
    %c0_32 = arith.constant 0 : index
    %c6 = arith.constant 6 : index
    %85 = memref.load %arg0[%c0_32, %c6] : memref<2x7xf32, #tpu.memory_space<smem>>
    %c1_33 = arith.constant 1 : index
    %c6_34 = arith.constant 6 : index
    %86 = memref.load %arg0[%c1_33, %c6_34] : memref<2x7xf32, #tpu.memory_space<smem>>
    %c0_i32_35 = arith.constant 0 : i32
    %87 = vector.broadcast %c0_i32_35 : i32 to vector<1x128xi32>
    %88 = arith.cmpi ne, %84, %87 : vector<1x128xi32>
    %89 = vector.broadcast %86 : f32 to vector<1x128xf32>
    %90 = vector.broadcast %85 : f32 to vector<1x128xf32>
    %91 = arith.select %88, %89, %90 : vector<1x128xi1>, vector<1x128xf32>
    %92 = arith.mulf %79, %91 : vector<1x128xf32>
    %93 = arith.addi %80, %84 : vector<1x128xi32>
    %c1_i32_36 = arith.constant 1 : i32
    %94 = vector.broadcast %c1_i32_36 : i32 to vector<1x128xi32>
    %95 = arith.andi %93, %94 : vector<1x128xi32>
    %c2_i32_37 = arith.constant 2 : i32
    %96 = vector.broadcast %c2_i32_37 : i32 to vector<1x128xi32>
    %97 = arith.andi %93, %96 : vector<1x128xi32>
    %c1_i32_38 = arith.constant 1 : i32
    %98 = vector.broadcast %c1_i32_38 : i32 to vector<1x128xi32>
    %99 = arith.subi %98, %95 : vector<1x128xi32>
    %c1_i32_39 = arith.constant 1 : i32
    %100 = vector.broadcast %c1_i32_39 : i32 to vector<1x128xi32>
    %101 = arith.subi %100, %97 : vector<1x128xi32>
    %102 = arith.muli %99, %101 : vector<1x128xi32>
    %103 = arith.sitofp %102 : vector<1x128xi32> to vector<1x128xf32>
    %c1_i32_40 = arith.constant 1 : i32
    %104 = vector.broadcast %c1_i32_40 : i32 to vector<1x128xi32>
    %105 = arith.subi %97, %104 : vector<1x128xi32>
    %106 = arith.muli %95, %105 : vector<1x128xi32>
    %107 = arith.sitofp %106 : vector<1x128xi32> to vector<1x128xf32>
    %108 = arith.mulf %92, %103 : vector<1x128xf32>
    %109 = arith.mulf %92, %107 : vector<1x128xf32>
    %110 = tpu.concatenate %108, %109 in 0 : vector<1x128xf32>, vector<1x128xf32> -> vector<2x128xf32>
    %c0_41 = arith.constant 0 : index
    %c0_42 = arith.constant 0 : index
    %111 = vector.load %arg1[%c0_41, %c0_42] : memref<128x128xf32, #tpu.memory_space<vmem>>, vector<128x128xf32>
    %cst_43 = arith.constant dense<0.000000e+00> : vector<2x128xf32>
    %112 = tpu.matmul %110, %111, %cst_43 {dimension_numbers = #tpu.dot_dimension_numbers<[1], [0], [0], [1], [0, 0, 1, 1], [], []>, precision = #tpu.contract_precision<fp32>} : vector<2x128xf32>, vector<128x128xf32>, vector<2x128xf32> -> vector<2x128xf32>
    %113 = vector.extract_strided_slice %112 {offsets = [0, 0], sizes = [1, 128], strides = [1, 1]} : vector<2x128xf32> to vector<1x128xf32>
    %114 = vector.extract_strided_slice %112 {offsets = [0, 0], sizes = [1, 128], strides = [1, 1]} : vector<2x128xf32> to vector<1x128xf32>
    %115 = arith.mulf %113, %114 : vector<1x128xf32>
    %116 = vector.extract_strided_slice %112 {offsets = [1, 0], sizes = [1, 128], strides = [1, 1]} : vector<2x128xf32> to vector<1x128xf32>
    %117 = vector.extract_strided_slice %112 {offsets = [1, 0], sizes = [1, 128], strides = [1, 1]} : vector<2x128xf32> to vector<1x128xf32>
    %118 = arith.mulf %116, %117 : vector<1x128xf32>
    %119 = arith.addf %115, %118 : vector<1x128xf32>
    %c64_i32 = arith.constant 64 : i32
    %120 = tpu.dynamic_rotate %119 by %c64_i32 dim 1 : vector<1x128xf32>, i32 -> vector<1x128xf32>
    %121 = arith.addf %119, %120 : vector<1x128xf32>
    %c32_i32 = arith.constant 32 : i32
    %122 = tpu.dynamic_rotate %121 by %c32_i32 dim 1 : vector<1x128xf32>, i32 -> vector<1x128xf32>
    %123 = arith.addf %121, %122 : vector<1x128xf32>
    %c16_i32 = arith.constant 16 : i32
    %124 = tpu.dynamic_rotate %123 by %c16_i32 dim 1 : vector<1x128xf32>, i32 -> vector<1x128xf32>
    %125 = arith.addf %123, %124 : vector<1x128xf32>
    %c8_i32 = arith.constant 8 : i32
    %126 = tpu.dynamic_rotate %125 by %c8_i32 dim 1 : vector<1x128xf32>, i32 -> vector<1x128xf32>
    %127 = arith.addf %125, %126 : vector<1x128xf32>
    %c0_44 = arith.constant 0 : index
    %c0_45 = arith.constant 0 : index
    %128 = vector.load %arg2[%c0_44, %c0_45] : memref<1x128xf32, #tpu.memory_space<vmem>>, vector<1x128xf32>
    tpu.vector_store %arg2[%c0_44, %c0_45], %127 {strides = array<i32>} : memref<1x128xf32, #tpu.memory_space<vmem>>, vector<1x128xf32>,
    return
  }
}

</mosaic_0001>

<llo_original>
// kernel: quantum_neural_net_forward.1
$region0: #{quantum_neural_net_forward.1}
  #allocation0 [shape = 'u32[]', space=smem, size = 0x4, offset = 0x4, fixed_abs, tag = 'smem constant byte address 0x4 - core index']
  #allocation1 [shape = 'u32[144,128]{1,0:T(1,128)}', space=vmem, size = 0x12000, scoped, tag = 'internal scratch']
  %s0 = inlined_call_operand.vmem [shape: f32[2,7], index: 0, kind: input, shape index: {}]
  %s1 = inlined_call_operand.hbm [shape: f32[128,128], index: 1, kind: input, shape index: {}]
  %s2 = inlined_call_operand.vmem [shape: f32[1,128], index: 2, kind: output, shape index: {}]
  %s3 = sld [smem:[#allocation0]]
  $region26: #{quantum_neural_net_forward.1} parent=0
    _
  %s5 = ssub.s32 1, %s3
  %s6 = scalar_select 0, %s5, %s3
  $region1: #{quantum_neural_net_forward.1} parent=0
    #allocation2 [shape = 'u8[1024]{0}', space=smem, size = 0x400, scoped, tag = 'input window, operand 0, single buffered']
    #allocation3 [shape = 's32[1]{0}', space=sflag, size = 0x4, scoped, tag = 'scoped memory for quantum_neural_net_forward.1']
    #allocation4 [shape = 's32[1]{0}', space=sflag, size = 0x4, scoped, tag = 'scoped memory for quantum_neural_net_forward.1']
    #allocation5 [shape = 'u8[65536]{0}', space=vmem, size = 0x10000, scoped, tag = 'input window, operand 1, single buffered']
    %7 = vsyncpa [#allocation4], 0
    %8 = vsyncpa [#allocation3], 0
    // Predicated region
    $region2: #{quantum_neural_net_forward.1} parent=1 // pred_check
      _
    $region3: #{quantum_neural_net_forward.1} parent=1 // pred_check_branch
      %10 = sbr.rel (0) target = $region5
    $region4: #{quantum_neural_net_forward.1} parent=1 // pred_region
      %s12 = ssub.s32 32, 32
      %13 = vsyncadd [#allocation4], %s12
      %s15 = sshll.u32 %s0, 4
      %s16 = int_to_ptr.vmem [resolvable:$true] %s15
      %18 = dma.vmem_to_smem %s16, 32, [#allocation2], [#allocation4]
    $region5: #{quantum_neural_net_forward.1} parent=1 // pred_fallthru
      _
    // Predicated region
    $region6: #{quantum_neural_net_forward.1} parent=1 // pred_check
      _
    $region7: #{quantum_neural_net_forward.1} parent=1 // pred_check_branch
      %20 = sbr.rel (0) target = $region9
    $region8: #{quantum_neural_net_forward.1} parent=1 // pred_region
      %s22 = ssub.s32 2048, 2048
      %23 = vsyncadd [#allocation3], %s22
      %s24 = sshll.u32 [#allocation5], 4
      %s25 = int_to_ptr.vmem [resolvable:$true] %s24
      %30 = dma.hbm_to_vmem [thread:$0]  %s1, 2048, %s25, [#allocation3], 128, 128, 8
    $region9: #{quantum_neural_net_forward.1} parent=1 // pred_fallthru
      _
    // Predicated region
    $region10: #{quantum_neural_net_forward.1} parent=1 // pred_check
      _
    $region11: #{quantum_neural_net_forward.1} parent=1 // pred_check_branch
      %32 = sbr.rel (0) target = $region13
    $region12: #{quantum_neural_net_forward.1} parent=1 // pred_region
      %33 = dma.done [#allocation4], 32
    $region13: #{quantum_neural_net_forward.1} parent=1 // pred_fallthru
      _
    // Predicated region
    $region14: #{quantum_neural_net_forward.1} parent=1 // pred_check
      _
    $region15: #{quantum_neural_net_forward.1} parent=1 // pred_check_branch
      %35 = sbr.rel (0) target = $region17
    $region16: #{quantum_neural_net_forward.1} parent=1 // pred_region
      %36 = dma.done [#allocation3], 2048
    $region17: #{quantum_neural_net_forward.1} parent=1 // pred_fallthru
      _
    %37 = sfence
    %v38 = vlaneseq
    %v39 = vand.u32 %v38, 127
    %v40 = vand.u32 %v39, 1
    %s41 = sld [smem:[#allocation2]]
    %s42 = sld [smem:[#allocation2 + $0x80]]
    %vm43 = vcmp.ne.s32.totalorder %v40, 0
    %v44 = vstv %s42
    %v45 = vstv %s41
    %v46 = vsel %vm43, %v44, %v45
    %v47 = vshra.s32 %v39, 1
    %v48 = vand.u32 %v47, 1
    %s49 = sld [smem:[#allocation2 + $0x1]]
    %s50 = sld [smem:[#allocation2 + $0x81]]
    %vm51 = vcmp.ne.s32.totalorder %v48, 0
    %v52 = vstv %s50
    %v53 = vstv %s49
    %v54 = vsel %vm51, %v52, %v53
    %v55 = vmul.f32 %v46, %v54
    %v56 = vadd.s32 %v40, %v48
    %v57 = vshra.s32 %v39, 2
    %v58 = vand.u32 %v57, 1
    %s59 = sld [smem:[#allocation2 + $0x2]]
    %s60 = sld [smem:[#allocation2 + $0x82]]
    %vm61 = vcmp.ne.s32.totalorder %v58, 0
    %v62 = vstv %s60
    %v63 = vstv %s59
    %v64 = vsel %vm61, %v62, %v63
    %v65 = vmul.f32 %v55, %v64
    %v66 = vadd.s32 %v56, %v58
    %v67 = vshra.s32 %v39, 3
    %v68 = vand.u32 %v67, 1
    %s69 = sld [smem:[#allocation2 + $0x3]]
    %s70 = sld [smem:[#allocation2 + $0x83]]
    %vm71 = vcmp.ne.s32.totalorder %v68, 0
    %v72 = vstv %s70
    %v73 = vstv %s69
    %v74 = vsel %vm71, %v72, %v73
    %v75 = vmul.f32 %v65, %v74
    %v76 = vadd.s32 %v66, %v68
    %v77 = vshra.s32 %v39, 4
    %v78 = vand.u32 %v77, 1
    %s79 = sld [smem:[#allocation2 + $0x4]]
    %s80 = sld [smem:[#allocation2 + $0x84]]
    %vm81 = vcmp.ne.s32.totalorder %v78, 0
    %v82 = vstv %s80
    %v83 = vstv %s79
    %v84 = vsel %vm81, %v82, %v83
    %v85 = vmul.f32 %v75, %v84
    %v86 = vadd.s32 %v76, %v78
    %v87 = vshra.s32 %v39, 5
    %v88 = vand.u32 %v87, 1
    %s89 = sld [smem:[#allocation2 + $0x5]]
    %s90 = sld [smem:[#allocation2 + $0x85]]
    %vm91 = vcmp.ne.s32.totalorder %v88, 0
    %v92 = vstv %s90
    %v93 = vstv %s89
    %v94 = vsel %vm91, %v92, %v93
    %v95 = vmul.f32 %v85, %v94
    %v96 = vadd.s32 %v86, %v88
    %v97 = vshra.s32 %v39, 6
    %v98 = vand.u32 %v97, 1
    %s99 = sld [smem:[#allocation2 + $0x6]]
    %s100 = sld [smem:[#allocation2 + $0x86]]
    %vm101 = vcmp.ne.s32.totalorder %v98, 0
    %v102 = vstv %s100
    %v103 = vstv %s99
    %v104 = vsel %vm101, %v102, %v103
    %v105 = vmul.f32 %v95, %v104
    %v106 = vadd.s32 %v96, %v98
    %v107 = vand.u32 %v106, 1
    %v108 = vand.u32 %v106, 2
    %v109 = vsub.s32 1, %v107
    %v110 = vsub.s32 1, %v108
    %v111 = vmul.u32 %v109, %v110
    %v112 = vcvt.s32.f32 %v111
    %v113 = vsub.s32 %v108, 1
    %v114 = vmul.u32 %v107, %v113
    %v115 = vcvt.s32.f32 %v114
    %v116 = vmul.f32 %v105, %v112
    %v117 = vmul.f32 %v105, %v115
    %vm118 = vcmask 1040384
    %v119 = vsel %vm118, %v116, %v117
    %v120 = vld [vmem:[#allocation5] sm:$0xff]
    %v121 = vld [vmem:[#allocation5 + $0x8] sm:$0xff]
    %v122 = vld [vmem:[#allocation5 + $0x10] sm:$0xff]
    %v123 = vld [vmem:[#allocation5 + $0x18] sm:$0xff]
    %v124 = vld [vmem:[#allocation5 + $0x20] sm:$0xff]
    %v125 = vld [vmem:[#allocation5 + $0x28] sm:$0xff]
    %v126 = vld [vmem:[#allocation5 + $0x30] sm:$0xff]
    %v127 = vld [vmem:[#allocation5 + $0x38] sm:$0xff]
    %v128 = vld [vmem:[#allocation5 + $0x40] sm:$0xff]
    %v129 = vld [vmem:[#allocation5 + $0x48] sm:$0xff]
    %v130 = vld [vmem:[#allocation5 + $0x50] sm:$0xff]
    %v131 = vld [vmem:[#allocation5 + $0x58] sm:$0xff]
    %v132 = vld [vmem:[#allocation5 + $0x60] sm:$0xff]
    %v133 = vld [vmem:[#allocation5 + $0x68] sm:$0xff]
    %v134 = vld [vmem:[#allocation5 + $0x70] sm:$0xff]
    %v135 = vld [vmem:[#allocation5 + $0x78] sm:$0xff]
    %136 = vmatprep.subr.mxu0 0.0
    %v137 = vand.u32 %v135, 4294901760
    %138 = vmatpush1.msra.mxu0 %v137
    %139 = vmatprep.subr.mxu0 0.0
    %v140 = vand.u32 %v134, 4294901760
    %141 = vmatpush1.msra.mxu0 %v140
    %142 = vmatprep.subr.mxu0 0.0
    %v143 = vand.u32 %v133, 4294901760
    %144 = vmatpush1.msra.mxu0 %v143
    %145 = vmatprep.subr.mxu0 0.0
    %v146 = vand.u32 %v132, 4294901760
    %147 = vmatpush1.msra.mxu0 %v146
    %148 = vmatprep.subr.mxu0 0.0
    %v149 = vand.u32 %v131, 4294901760
    %150 = vmatpush1.msra.mxu0 %v149
    %151 = vmatprep.subr.mxu0 0.0
    %v152 = vand.u32 %v130, 4294901760
    %153 = vmatpush1.msra.mxu0 %v152
    %154 = vmatprep.subr.mxu0 0.0
    %v155 = vand.u32 %v129, 4294901760
    %156 = vmatpush1.msra.mxu0 %v155
    %157 = vmatprep.subr.mxu0 0.0
    %v158 = vand.u32 %v128, 4294901760
    %159 = vmatpush1.msra.mxu0 %v158
    %160 = vmatprep.subr.mxu0 0.0
    %v161 = vand.u32 %v127, 4294901760
    %162 = vmatpush1.msra.mxu0 %v161
    %163 = vmatprep.subr.mxu0 0.0
    %v164 = vand.u32 %v126, 4294901760
    %165 = vmatpush1.msra.mxu0 %v164
    %166 = vmatprep.subr.mxu0 0.0
    %v167 = vand.u32 %v125, 4294901760
    %168 = vmatpush1.msra.mxu0 %v167
    %169 = vmatprep.subr.mxu0 0.0
    %v170 = vand.u32 %v124, 4294901760
    %171 = vmatpush1.msra.mxu0 %v170
    %172 = vmatprep.subr.mxu0 0.0
    %v173 = vand.u32 %v123, 4294901760
    %174 = vmatpush1.msra.mxu0 %v173
    %175 = vmatprep.subr.mxu0 0.0
    %v176 = vand.u32 %v122, 4294901760
    %177 = vmatpush1.msra.mxu0 %v176
    %178 = vmatprep.subr.mxu0 0.0
    %v179 = vand.u32 %v121, 4294901760
    %180 = vmatpush1.msra.mxu0 %v179
    %181 = vmatprep.subr.mxu0 0.0
    %v182 = vand.u32 %v120, 4294901760
    %183 = vmatpush1.msra.mxu0 %v182
    %184 = vmatprep.subr.mxu0 0.0
    %185 = vmatpush2.msra.mxu0 0.0
    %186 = vmatprep.subr.mxu0 0.0
    %187 = vmatpush2.msra.mxu0 0.0
    %188 = vmatprep.subr.mxu0 0.0
    %189 = vmatpush2.msra.mxu0 0.0
    %190 = vmatprep.subr.mxu0 0.0
    %191 = vmatpush2.msra.mxu0 0.0
    %192 = vmatprep.subr.mxu0 0.0
    %193 = vmatpush2.msra.mxu0 0.0
    %194 = vmatprep.subr.mxu0 0.0
    %195 = vmatpush2.msra.mxu0 0.0
    %196 = vmatprep.subr.mxu0 0.0
    %197 = vmatpush2.msra.mxu0 0.0
    %198 = vmatprep.subr.mxu0 0.0
    %199 = vmatpush2.msra.mxu0 0.0
    %200 = vmatprep.subr.mxu0 0.0
    %201 = vmatpush2.msra.mxu0 0.0
    %202 = vmatprep.subr.mxu0 0.0
    %203 = vmatpush2.msra.mxu0 0.0
    %204 = vmatprep.subr.mxu0 0.0
    %205 = vmatpush2.msra.mxu0 0.0
    %206 = vmatprep.subr.mxu0 0.0
    %207 = vmatpush2.msra.mxu0 0.0
    %208 = vmatprep.subr.mxu0 0.0
    %209 = vmatpush2.msra.mxu0 0.0
    %210 = vmatprep.subr.mxu0 0.0
    %211 = vmatpush2.msra.mxu0 0.0
    %212 = vmatprep.subr.mxu0 0.0
    %213 = vmatpush2.msra.mxu0 0.0
    %214 = vmatprep.subr.mxu0 0.0
    %215 = vmatpush2.msra.mxu0 0.0
    %216 = vmatprep.mubr.f32.mxu0 0.0
    %v217 = vand.u32 %v119, 4294901760
    %v218 = vsub.f32 %v119, %v217
    %v219 = vand.u32 %v218, 4294901760
    %v220 = vsub.f32 %v218, %v219
    %v221 = vand.u32 %v220, 4294901760
    %222 = vmatmul.mubr.f32.gmra.mxu0 %v221
    %v223 = vpop.f32.mrf.mxu0
    %v224 = vadd.f32 0.0, %v223
    %v225 = vpop.f32.mrf.mxu0
    %226 = vdwg.mxu0
    %227 = vmatprep.subr.mxu0 0.0
    %v228 = vand.u32 %v135, 4294901760
    %v229 = vsub.f32 %v135, %v228
    %v230 = vand.u32 %v229, 4294901760
    %v231 = vsub.f32 %v229, %v230
    %v232 = vand.u32 %v231, 4294901760
    %233 = vmatpush1.msra.mxu0 %v232
    %234 = vmatprep.subr.mxu0 0.0
    %v235 = vand.u32 %v134, 4294901760
    %v236 = vsub.f32 %v134, %v235
    %v237 = vand.u32 %v236, 4294901760
    %v238 = vsub.f32 %v236, %v237
    %v239 = vand.u32 %v238, 4294901760
    %240 = vmatpush1.msra.mxu0 %v239
    %241 = vmatprep.subr.mxu0 0.0
    %v242 = vand.u32 %v133, 4294901760
    %v243 = vsub.f32 %v133, %v242
    %v244 = vand.u32 %v243, 4294901760
    %v245 = vsub.f32 %v243, %v244
    %v246 = vand.u32 %v245, 4294901760
    %247 = vmatpush1.msra.mxu0 %v246
    %248 = vmatprep.subr.mxu0 0.0
    %v249 = vand.u32 %v132, 4294901760
    %v250 = vsub.f32 %v132, %v249
    %v251 = vand.u32 %v250, 4294901760
    %v252 = vsub.f32 %v250, %v251
    %v253 = vand.u32 %v252, 4294901760
    %254 = vmatpush1.msra.mxu0 %v253
    %255 = vmatprep.subr.mxu0 0.0
    %v256 = vand.u32 %v131, 4294901760
    %v257 = vsub.f32 %v131, %v256
    %v258 = vand.u32 %v257, 4294901760
    %v259 = vsub.f32 %v257, %v258
    %v260 = vand.u32 %v259, 4294901760
    %261 = vmatpush1.msra.mxu0 %v260
    %262 = vmatprep.subr.mxu0 0.0
    %v263 = vand.u32 %v130, 4294901760
    %v264 = vsub.f32 %v130, %v263
    %v265 = vand.u32 %v264, 4294901760
    %v266 = vsub.f32 %v264, %v265
    %v267 = vand.u32 %v266, 4294901760
    %268 = vmatpush1.msra.mxu0 %v267
    %269 = vmatprep.subr.mxu0 0.0
    %v270 = vand.u32 %v129, 4294901760
    %v271 = vsub.f32 %v129, %v270
    %v272 = vand.u32 %v271, 4294901760
    %v273 = vsub.f32 %v271, %v272
    %v274 = vand.u32 %v273, 4294901760
    %275 = vmatpush1.msra.mxu0 %v274
    %276 = vmatprep.subr.mxu0 0.0
    %v277 = vand.u32 %v128, 4294901760
    %v278 = vsub.f32 %v128, %v277
    %v279 = vand.u32 %v278, 4294901760
    %v280 = vsub.f32 %v278, %v279
    %v281 = vand.u32 %v280, 4294901760
    %282 = vmatpush1.msra.mxu0 %v281
    %283 = vmatprep.subr.mxu0 0.0
    %v284 = vand.u32 %v127, 4294901760
    %v285 = vsub.f32 %v127, %v284
    %v286 = vand.u32 %v285, 4294901760
    %v287 = vsub.f32 %v285, %v286
    %v288 = vand.u32 %v287, 4294901760
    %289 = vmatpush1.msra.mxu0 %v288
    %290 = vmatprep.subr.mxu0 0.0
    %v291 = vand.u32 %v126, 4294901760
    %v292 = vsub.f32 %v126, %v291
    %v293 = vand.u32 %v292, 4294901760
    %v294 = vsub.f32 %v292, %v293
    %v295 = vand.u32 %v294, 4294901760
    %296 = vmatpush1.msra.mxu0 %v295
    %297 = vmatprep.subr.mxu0 0.0
    %v298 = vand.u32 %v125, 4294901760
    %v299 = vsub.f32 %v125, %v298
    %v300 = vand.u32 %v299, 4294901760
    %v301 = vsub.f32 %v299, %v300
    %v302 = vand.u32 %v301, 4294901760
    %303 = vmatpush1.msra.mxu0 %v302
    %304 = vmatprep.subr.mxu0 0.0
    %v305 = vand.u32 %v124, 4294901760
    %v306 = vsub.f32 %v124, %v305
    %v307 = vand.u32 %v306, 4294901760
    %v308 = vsub.f32 %v306, %v307
    %v309 = vand.u32 %v308, 4294901760
    %310 = vmatpush1.msra.mxu0 %v309
    %311 = vmatprep.subr.mxu0 0.0
    %v312 = vand.u32 %v123, 4294901760
    %v313 = vsub.f32 %v123, %v312
    %v314 = vand.u32 %v313, 4294901760
    %v315 = vsub.f32 %v313, %v314
    %v316 = vand.u32 %v315, 4294901760
    %317 = vmatpush1.msra.mxu0 %v316
    %318 = vmatprep.subr.mxu0 0.0
    %v319 = vand.u32 %v122, 4294901760
    %v320 = vsub.f32 %v122, %v319
    %v321 = vand.u32 %v320, 4294901760
    %v322 = vsub.f32 %v320, %v321
    %v323 = vand.u32 %v322, 4294901760
    %324 = vmatpush1.msra.mxu0 %v323
    %325 = vmatprep.subr.mxu0 0.0
    %v326 = vand.u32 %v121, 4294901760
    %v327 = vsub.f32 %v121, %v326
    %v328 = vand.u32 %v327, 4294901760
    %v329 = vsub.f32 %v327, %v328
    %v330 = vand.u32 %v329, 4294901760
    %331 = vmatpush1.msra.mxu0 %v330
    %332 = vmatprep.subr.mxu0 0.0
    %v333 = vand.u32 %v120, 4294901760
    %v334 = vsub.f32 %v120, %v333
    %v335 = vand.u32 %v334, 4294901760
    %v336 = vsub.f32 %v334, %v335
    %v337 = vand.u32 %v336, 4294901760
    %338 = vmatpush1.msra.mxu0 %v337
    %339 = vmatprep.subr.mxu0 0.0
    %340 = vmatpush2.msra.mxu0 0.0
    %341 = vmatprep.subr.mxu0 0.0
    %342 = vmatpush2.msra.mxu0 0.0
    %343 = vmatprep.subr.mxu0 0.0
    %344 = vmatpush2.msra.mxu0 0.0
    %345 = vmatprep.subr.mxu0 0.0
    %346 = vmatpush2.msra.mxu0 0.0
    %347 = vmatprep.subr.mxu0 0.0
    %348 = vmatpush2.msra.mxu0 0.0
    %349 = vmatprep.subr.mxu0 0.0
    %350 = vmatpush2.msra.mxu0 0.0
    %351 = vmatprep.subr.mxu0 0.0
    %352 = vmatpush2.msra.mxu0 0.0
    %353 = vmatprep.subr.mxu0 0.0
    %354 = vmatpush2.msra.mxu0 0.0
    %355 = vmatprep.subr.mxu0 0.0
    %356 = vmatpush2.msra.mxu0 0.0
    %357 = vmatprep.subr.mxu0 0.0
    %358 = vmatpush2.msra.mxu0 0.0
    %359 = vmatprep.subr.mxu0 0.0
    %360 = vmatpush2.msra.mxu0 0.0
    %361 = vmatprep.subr.mxu0 0.0
    %362 = vmatpush2.msra.mxu0 0.0
    %363 = vmatprep.subr.mxu0 0.0
    %364 = vmatpush2.msra.mxu0 0.0
    %365 = vmatprep.subr.mxu0 0.0
    %366 = vmatpush2.msra.mxu0 0.0
    %367 = vmatprep.subr.mxu0 0.0
    %368 = vmatpush2.msra.mxu0 0.0
    %369 = vmatprep.subr.mxu0 0.0
    %370 = vmatpush2.msra.mxu0 0.0
    %371 = vmatprep.mubr.f32.mxu0 0.0
    %v372 = vand.u32 %v119, 4294901760
    %373 = vmatmul.mubr.f32.gmra.mxu0 %v372
    %v374 = vpop.f32.mrf.mxu0
    %v375 = vadd.f32 %v224, %v374
    %v376 = vpop.f32.mrf.mxu0
    %377 = vdwg.mxu0
    %378 = vmatprep.subr.mxu0 0.0
    %v379 = vand.u32 %v135, 4294901760
    %v380 = vsub.f32 %v135, %v379
    %381 = vmatpush1.msra.mxu0 %v380
    %382 = vmatprep.subr.mxu0 0.0
    %v383 = vand.u32 %v134, 4294901760
    %v384 = vsub.f32 %v134, %v383
    %385 = vmatpush1.msra.mxu0 %v384
    %386 = vmatprep.subr.mxu0 0.0
    %v387 = vand.u32 %v133, 4294901760
    %v388 = vsub.f32 %v133, %v387
    %389 = vmatpush1.msra.mxu0 %v388
    %390 = vmatprep.subr.mxu0 0.0
    %v391 = vand.u32 %v132, 4294901760
    %v392 = vsub.f32 %v132, %v391
    %393 = vmatpush1.msra.mxu0 %v392
    %394 = vmatprep.subr.mxu0 0.0
    %v395 = vand.u32 %v131, 4294901760
    %v396 = vsub.f32 %v131, %v395
    %397 = vmatpush1.msra.mxu0 %v396
    %398 = vmatprep.subr.mxu0 0.0
    %v399 = vand.u32 %v130, 4294901760
    %v400 = vsub.f32 %v130, %v399
    %401 = vmatpush1.msra.mxu0 %v400
    %402 = vmatprep.subr.mxu0 0.0
    %v403 = vand.u32 %v129, 4294901760
    %v404 = vsub.f32 %v129, %v403
    %405 = vmatpush1.msra.mxu0 %v404
    %406 = vmatprep.subr.mxu0 0.0
    %v407 = vand.u32 %v128, 4294901760
    %v408 = vsub.f32 %v128, %v407
    %409 = vmatpush1.msra.mxu0 %v408
    %410 = vmatprep.subr.mxu0 0.0
    %v411 = vand.u32 %v127, 4294901760
    %v412 = vsub.f32 %v127, %v411
    %413 = vmatpush1.msra.mxu0 %v412
    %414 = vmatprep.subr.mxu0 0.0
    %v415 = vand.u32 %v126, 4294901760
    %v416 = vsub.f32 %v126, %v415
    %417 = vmatpush1.msra.mxu0 %v416
    %418 = vmatprep.subr.mxu0 0.0
    %v419 = vand.u32 %v125, 4294901760
    %v420 = vsub.f32 %v125, %v419
    %421 = vmatpush1.msra.mxu0 %v420
    %422 = vmatprep.subr.mxu0 0.0
    %v423 = vand.u32 %v124, 4294901760
    %v424 = vsub.f32 %v124, %v423
    %425 = vmatpush1.msra.mxu0 %v424
    %426 = vmatprep.subr.mxu0 0.0
    %v427 = vand.u32 %v123, 4294901760
    %v428 = vsub.f32 %v123, %v427
    %429 = vmatpush1.msra.mxu0 %v428
    %430 = vmatprep.subr.mxu0 0.0
    %v431 = vand.u32 %v122, 4294901760
    %v432 = vsub.f32 %v122, %v431
    %433 = vmatpush1.msra.mxu0 %v432
    %434 = vmatprep.subr.mxu0 0.0
    %v435 = vand.u32 %v121, 4294901760
    %v436 = vsub.f32 %v121, %v435
    %437 = vmatpush1.msra.mxu0 %v436
    %438 = vmatprep.subr.mxu0 0.0
    %v439 = vand.u32 %v120, 4294901760
    %v440 = vsub.f32 %v120, %v439
    %441 = vmatpush1.msra.mxu0 %v440
    %442 = vmatprep.subr.mxu0 0.0
    %443 = vmatpush2.msra.mxu0 0.0
    %444 = vmatprep.subr.mxu0 0.0
    %445 = vmatpush2.msra.mxu0 0.0
    %446 = vmatprep.subr.mxu0 0.0
    %447 = vmatpush2.msra.mxu0 0.0
    %448 = vmatprep.subr.mxu0 0.0
    %449 = vmatpush2.msra.mxu0 0.0
    %450 = vmatprep.subr.mxu0 0.0
    %451 = vmatpush2.msra.mxu0 0.0
    %452 = vmatprep.subr.mxu0 0.0
    %453 = vmatpush2.msra.mxu0 0.0
    %454 = vmatprep.subr.mxu0 0.0
    %455 = vmatpush2.msra.mxu0 0.0
    %456 = vmatprep.subr.mxu0 0.0
    %457 = vmatpush2.msra.mxu0 0.0
    %458 = vmatprep.subr.mxu0 0.0
    %459 = vmatpush2.msra.mxu0 0.0
    %460 = vmatprep.subr.mxu0 0.0
    %461 = vmatpush2.msra.mxu0 0.0
    %462 = vmatprep.subr.mxu0 0.0
    %463 = vmatpush2.msra.mxu0 0.0
    %464 = vmatprep.subr.mxu0 0.0
    %465 = vmatpush2.msra.mxu0 0.0
    %466 = vmatprep.subr.mxu0 0.0
    %467 = vmatpush2.msra.mxu0 0.0
    %468 = vmatprep.subr.mxu0 0.0
    %469 = vmatpush2.msra.mxu0 0.0
    %470 = vmatprep.subr.mxu0 0.0
    %471 = vmatpush2.msra.mxu0 0.0
    %472 = vmatprep.subr.mxu0 0.0
    %473 = vmatpush2.msra.mxu0 0.0
    %474 = vmatprep.mubr.f32.mxu0 0.0
    %v475 = vand.u32 %v119, 4294901760
    %v476 = vsub.f32 %v119, %v475
    %477 = vmatmul.mubr.f32.gmra.mxu0 %v476
    %v478 = vpop.f32.mrf.mxu0
    %v479 = vadd.f32 %v375, %v478
    %v480 = vpop.f32.mrf.mxu0
    %481 = vdwg.mxu0
    %482 = vmatprep.subr.mxu0 0.0
    %v483 = vand.u32 %v135, 4294901760
    %484 = vmatpush1.msra.mxu0 %v483
    %485 = vmatprep.subr.mxu0 0.0
    %v486 = vand.u32 %v134, 4294901760
    %487 = vmatpush1.msra.mxu0 %v486
    %488 = vmatprep.subr.mxu0 0.0
    %v489 = vand.u32 %v133, 4294901760
    %490 = vmatpush1.msra.mxu0 %v489
    %491 = vmatprep.subr.mxu0 0.0
    %v492 = vand.u32 %v132, 4294901760
    %493 = vmatpush1.msra.mxu0 %v492
    %494 = vmatprep.subr.mxu0 0.0
    %v495 = vand.u32 %v131, 4294901760
    %496 = vmatpush1.msra.mxu0 %v495
    %497 = vmatprep.subr.mxu0 0.0
    %v498 = vand.u32 %v130, 4294901760
    %499 = vmatpush1.msra.mxu0 %v498
    %500 = vmatprep.subr.mxu0 0.0
    %v501 = vand.u32 %v129, 4294901760
    %502 = vmatpush1.msra.mxu0 %v501
    %503 = vmatprep.subr.mxu0 0.0
    %v504 = vand.u32 %v128, 4294901760
    %505 = vmatpush1.msra.mxu0 %v504
    %506 = vmatprep.subr.mxu0 0.0
    %v507 = vand.u32 %v127, 4294901760
    %508 = vmatpush1.msra.mxu0 %v507
    %509 = vmatprep.subr.mxu0 0.0
    %v510 = vand.u32 %v126, 4294901760
    %511 = vmatpush1.msra.mxu0 %v510
    %512 = vmatprep.subr.mxu0 0.0
    %v513 = vand.u32 %v125, 4294901760
    %514 = vmatpush1.msra.mxu0 %v513
    %515 = vmatprep.subr.mxu0 0.0
    %v516 = vand.u32 %v124, 4294901760
    %517 = vmatpush1.msra.mxu0 %v516
    %518 = vmatprep.subr.mxu0 0.0
    %v519 = vand.u32 %v123, 4294901760
    %520 = vmatpush1.msra.mxu0 %v519
    %521 = vmatprep.subr.mxu0 0.0
    %v522 = vand.u32 %v122, 4294901760
    %523 = vmatpush1.msra.mxu0 %v522
    %524 = vmatprep.subr.mxu0 0.0
    %v525 = vand.u32 %v121, 4294901760
    %526 = vmatpush1.msra.mxu0 %v525
    %527 = vmatprep.subr.mxu0 0.0
    %v528 = vand.u32 %v120, 4294901760
    %529 = vmatpush1.msra.mxu0 %v528
    %530 = vmatprep.subr.mxu0 0.0
    %531 = vmatpush2.msra.mxu0 0.0
    %532 = vmatprep.subr.mxu0 0.0
    %533 = vmatpush2.msra.mxu0 0.0
    %534 = vmatprep.subr.mxu0 0.0
    %535 = vmatpush2.msra.mxu0 0.0
    %536 = vmatprep.subr.mxu0 0.0
    %537 = vmatpush2.msra.mxu0 0.0
    %538 = vmatprep.subr.mxu0 0.0
    %539 = vmatpush2.msra.mxu0 0.0
    %540 = vmatprep.subr.mxu0 0.0
    %541 = vmatpush2.msra.mxu0 0.0
    %542 = vmatprep.subr.mxu0 0.0
    %543 = vmatpush2.msra.mxu0 0.0
    %544 = vmatprep.subr.mxu0 0.0
    %545 = vmatpush2.msra.mxu0 0.0
    %546 = vmatprep.subr.mxu0 0.0
    %547 = vmatpush2.msra.mxu0 0.0
    %548 = vmatprep.subr.mxu0 0.0
    %549 = vmatpush2.msra.mxu0 0.0
    %550 = vmatprep.subr.mxu0 0.0
    %551 = vmatpush2.msra.mxu0 0.0
    %552 = vmatprep.subr.mxu0 0.0
    %553 = vmatpush2.msra.mxu0 0.0
    %554 = vmatprep.subr.mxu0 0.0
    %555 = vmatpush2.msra.mxu0 0.0
    %556 = vmatprep.subr.mxu0 0.0
    %557 = vmatpush2.msra.mxu0 0.0
    %558 = vmatprep.subr.mxu0 0.0
    %559 = vmatpush2.msra.mxu0 0.0
    %560 = vmatprep.subr.mxu0 0.0
    %561 = vmatpush2.msra.mxu0 0.0
    %562 = vmatprep.mubr.f32.mxu0 0.0
    %v563 = vand.u32 %v119, 4294901760
    %v564 = vsub.f32 %v119, %v563
    %v565 = vand.u32 %v564, 4294901760
    %566 = vmatmul.mubr.f32.gmra.mxu0 %v565
    %v567 = vpop.f32.mrf.mxu0
    %v568 = vadd.f32 %v479, %v567
    %v569 = vpop.f32.mrf.mxu0
    %570 = vdwg.mxu0
    %571 = vmatprep.subr.mxu0 0.0
    %v572 = vand.u32 %v135, 4294901760
    %v573 = vsub.f32 %v135, %v572
    %v574 = vand.u32 %v573, 4294901760
    %575 = vmatpush1.msra.mxu0 %v574
    %576 = vmatprep.subr.mxu0 0.0
    %v577 = vand.u32 %v134, 4294901760
    %v578 = vsub.f32 %v134, %v577
    %v579 = vand.u32 %v578, 4294901760
    %580 = vmatpush1.msra.mxu0 %v579
    %581 = vmatprep.subr.mxu0 0.0
    %v582 = vand.u32 %v133, 4294901760
    %v583 = vsub.f32 %v133, %v582
    %v584 = vand.u32 %v583, 4294901760
    %585 = vmatpush1.msra.mxu0 %v584
    %586 = vmatprep.subr.mxu0 0.0
    %v587 = vand.u32 %v132, 4294901760
    %v588 = vsub.f32 %v132, %v587
    %v589 = vand.u32 %v588, 4294901760
    %590 = vmatpush1.msra.mxu0 %v589
    %591 = vmatprep.subr.mxu0 0.0
    %v592 = vand.u32 %v131, 4294901760
    %v593 = vsub.f32 %v131, %v592
    %v594 = vand.u32 %v593, 4294901760
    %595 = vmatpush1.msra.mxu0 %v594
    %596 = vmatprep.subr.mxu0 0.0
    %v597 = vand.u32 %v130, 4294901760
    %v598 = vsub.f32 %v130, %v597
    %v599 = vand.u32 %v598, 4294901760
    %600 = vmatpush1.msra.mxu0 %v599
    %601 = vmatprep.subr.mxu0 0.0
    %v602 = vand.u32 %v129, 4294901760
    %v603 = vsub.f32 %v129, %v602
    %v604 = vand.u32 %v603, 4294901760
    %605 = vmatpush1.msra.mxu0 %v604
    %606 = vmatprep.subr.mxu0 0.0
    %v607 = vand.u32 %v128, 4294901760
    %v608 = vsub.f32 %v128, %v607
    %v609 = vand.u32 %v608, 4294901760
    %610 = vmatpush1.msra.mxu0 %v609
    %611 = vmatprep.subr.mxu0 0.0
    %v612 = vand.u32 %v127, 4294901760
    %v613 = vsub.f32 %v127, %v612
    %v614 = vand.u32 %v613, 4294901760
    %615 = vmatpush1.msra.mxu0 %v614
    %616 = vmatprep.subr.mxu0 0.0
    %v617 = vand.u32 %v126, 4294901760
    %v618 = vsub.f32 %v126, %v617
    %v619 = vand.u32 %v618, 4294901760
    %620 = vmatpush1.msra.mxu0 %v619
    %621 = vmatprep.subr.mxu0 0.0
    %v622 = vand.u32 %v125, 4294901760
    %v623 = vsub.f32 %v125, %v622
    %v624 = vand.u32 %v623, 4294901760
    %625 = vmatpush1.msra.mxu0 %v624
    %626 = vmatprep.subr.mxu0 0.0
    %v627 = vand.u32 %v124, 4294901760
    %v628 = vsub.f32 %v124, %v627
    %v629 = vand.u32 %v628, 4294901760
    %630 = vmatpush1.msra.mxu0 %v629
    %631 = vmatprep.subr.mxu0 0.0
    %v632 = vand.u32 %v123, 4294901760
    %v633 = vsub.f32 %v123, %v632
    %v634 = vand.u32 %v633, 4294901760
    %635 = vmatpush1.msra.mxu0 %v634
    %636 = vmatprep.subr.mxu0 0.0
    %v637 = vand.u32 %v122, 4294901760
    %v638 = vsub.f32 %v122, %v637
    %v639 = vand.u32 %v638, 4294901760
    %640 = vmatpush1.msra.mxu0 %v639
    %641 = vmatprep.subr.mxu0 0.0
    %v642 = vand.u32 %v121, 4294901760
    %v643 = vsub.f32 %v121, %v642
    %v644 = vand.u32 %v643, 4294901760
    %645 = vmatpush1.msra.mxu0 %v644
    %646 = vmatprep.subr.mxu0 0.0
    %v647 = vand.u32 %v120, 4294901760
    %v648 = vsub.f32 %v120, %v647
    %v649 = vand.u32 %v648, 4294901760
    %650 = vmatpush1.msra.mxu0 %v649
    %651 = vmatprep.subr.mxu0 0.0
    %652 = vmatpush2.msra.mxu0 0.0
    %653 = vmatprep.subr.mxu0 0.0
    %654 = vmatpush2.msra.mxu0 0.0
    %655 = vmatprep.subr.mxu0 0.0
    %656 = vmatpush2.msra.mxu0 0.0
    %657 = vmatprep.subr.mxu0 0.0
    %658 = vmatpush2.msra.mxu0 0.0
    %659 = vmatprep.subr.mxu0 0.0
    %660 = vmatpush2.msra.mxu0 0.0
    %661 = vmatprep.subr.mxu0 0.0
    %662 = vmatpush2.msra.mxu0 0.0
    %663 = vmatprep.subr.mxu0 0.0
    %664 = vmatpush2.msra.mxu0 0.0
    %665 = vmatprep.subr.mxu0 0.0
    %666 = vmatpush2.msra.mxu0 0.0
    %667 = vmatprep.subr.mxu0 0.0
    %668 = vmatpush2.msra.mxu0 0.0
    %669 = vmatprep.subr.mxu0 0.0
    %670 = vmatpush2.msra.mxu0 0.0
    %671 = vmatprep.subr.mxu0 0.0
    %672 = vmatpush2.msra.mxu0 0.0
    %673 = vmatprep.subr.mxu0 0.0
    %674 = vmatpush2.msra.mxu0 0.0
    %675 = vmatprep.subr.mxu0 0.0
    %676 = vmatpush2.msra.mxu0 0.0
    %677 = vmatprep.subr.mxu0 0.0
    %678 = vmatpush2.msra.mxu0 0.0
    %679 = vmatprep.subr.mxu0 0.0
    %680 = vmatpush2.msra.mxu0 0.0
    %681 = vmatprep.subr.mxu0 0.0
    %682 = vmatpush2.msra.mxu0 0.0
    %683 = vmatprep.mubr.f32.mxu0 0.0
    %v684 = vand.u32 %v119, 4294901760
    %685 = vmatmul.mubr.f32.gmra.mxu0 %v684
    %v686 = vpop.f32.mrf.mxu0
    %v687 = vadd.f32 %v568, %v686
    %v688 = vpop.f32.mrf.mxu0
    %689 = vdwg.mxu0
    %690 = vmatprep.subr.mxu0 0.0
    %v691 = vand.u32 %v135, 4294901760
    %692 = vmatpush1.msra.mxu0 %v691
    %693 = vmatprep.subr.mxu0 0.0
    %v694 = vand.u32 %v134, 4294901760
    %695 = vmatpush1.msra.mxu0 %v694
    %696 = vmatprep.subr.mxu0 0.0
    %v697 = vand.u32 %v133, 4294901760
    %698 = vmatpush1.msra.mxu0 %v697
    %699 = vmatprep.subr.mxu0 0.0
    %v700 = vand.u32 %v132, 4294901760
    %701 = vmatpush1.msra.mxu0 %v700
    %702 = vmatprep.subr.mxu0 0.0
    %v703 = vand.u32 %v131, 4294901760
    %704 = vmatpush1.msra.mxu0 %v703
    %705 = vmatprep.subr.mxu0 0.0
    %v706 = vand.u32 %v130, 4294901760
    %707 = vmatpush1.msra.mxu0 %v706
    %708 = vmatprep.subr.mxu0 0.0
    %v709 = vand.u32 %v129, 4294901760
    %710 = vmatpush1.msra.mxu0 %v709
    %711 = vmatprep.subr.mxu0 0.0
    %v712 = vand.u32 %v128, 4294901760
    %713 = vmatpush1.msra.mxu0 %v712
    %714 = vmatprep.subr.mxu0 0.0
    %v715 = vand.u32 %v127, 4294901760
    %716 = vmatpush1.msra.mxu0 %v715
    %717 = vmatprep.subr.mxu0 0.0
    %v718 = vand.u32 %v126, 4294901760
    %719 = vmatpush1.msra.mxu0 %v718
    %720 = vmatprep.subr.mxu0 0.0
    %v721 = vand.u32 %v125, 4294901760
    %722 = vmatpush1.msra.mxu0 %v721
    %723 = vmatprep.subr.mxu0 0.0
    %v724 = vand.u32 %v124, 4294901760
    %725 = vmatpush1.msra.mxu0 %v724
    %726 = vmatprep.subr.mxu0 0.0
    %v727 = vand.u32 %v123, 4294901760
    %728 = vmatpush1.msra.mxu0 %v727
    %729 = vmatprep.subr.mxu0 0.0
    %v730 = vand.u32 %v122, 4294901760
    %731 = vmatpush1.msra.mxu0 %v730
    %732 = vmatprep.subr.mxu0 0.0
    %v733 = vand.u32 %v121, 4294901760
    %734 = vmatpush1.msra.mxu0 %v733
    %735 = vmatprep.subr.mxu0 0.0
    %v736 = vand.u32 %v120, 4294901760
    %737 = vmatpush1.msra.mxu0 %v736
    %738 = vmatprep.subr.mxu0 0.0
    %739 = vmatpush2.msra.mxu0 0.0
    %740 = vmatprep.subr.mxu0 0.0
    %741 = vmatpush2.msra.mxu0 0.0
    %742 = vmatprep.subr.mxu0 0.0
    %743 = vmatpush2.msra.mxu0 0.0
    %744 = vmatprep.subr.mxu0 0.0
    %745 = vmatpush2.msra.mxu0 0.0
    %746 = vmatprep.subr.mxu0 0.0
    %747 = vmatpush2.msra.mxu0 0.0
    %748 = vmatprep.subr.mxu0 0.0
    %749 = vmatpush2.msra.mxu0 0.0
    %750 = vmatprep.subr.mxu0 0.0
    %751 = vmatpush2.msra.mxu0 0.0
    %752 = vmatprep.subr.mxu0 0.0
    %753 = vmatpush2.msra.mxu0 0.0
    %754 = vmatprep.subr.mxu0 0.0
    %755 = vmatpush2.msra.mxu0 0.0
    %756 = vmatprep.subr.mxu0 0.0
    %757 = vmatpush2.msra.mxu0 0.0
    %758 = vmatprep.subr.mxu0 0.0
    %759 = vmatpush2.msra.mxu0 0.0
    %760 = vmatprep.subr.mxu0 0.0
    %761 = vmatpush2.msra.mxu0 0.0
    %762 = vmatprep.subr.mxu0 0.0
    %763 = vmatpush2.msra.mxu0 0.0
    %764 = vmatprep.subr.mxu0 0.0
    %765 = vmatpush2.msra.mxu0 0.0
    %766 = vmatprep.subr.mxu0 0.0
    %767 = vmatpush2.msra.mxu0 0.0
    %768 = vmatprep.subr.mxu0 0.0
    %769 = vmatpush2.msra.mxu0 0.0
    %770 = vmatprep.mubr.f32.mxu0 0.0
    %v771 = vand.u32 %v119, 4294901760
    %772 = vmatmul.mubr.f32.gmra.mxu0 %v771
    %v773 = vpop.f32.mrf.mxu0
    %v774 = vadd.f32 %v687, %v773
    %v775 = vpop.f32.mrf.mxu0
    %776 = vdwg.mxu0
    %v777 = vmul.f32 %v774, %v774
    %v779 = vrot.slane %v777, 1
    %v781 = vadd.f32 %v777, %v779
    %782 = vrot.lane.b32.xlu0 %v781, 64
    %v783 = vpop.permute.xlu0 %782
    %v784 = vadd.f32 %v781, %v783
    %785 = vrot.lane.b32.xlu0 %v784, 32
    %v786 = vpop.permute.xlu0 %785
    %v787 = vadd.f32 %v784, %v786
    %788 = vrot.lane.b32.xlu0 %v787, 16
    %v789 = vpop.permute.xlu0 %788
    %v790 = vadd.f32 %v787, %v789
    %791 = vrot.lane.b32.xlu0 %v790, 8
    %v792 = vpop.permute.xlu0 %791
    %v793 = vadd.f32 %v790, %v792
    %794 = vst [vmem:[%s2] sm:$0x1] %v793
    // Predicated region
    $region18: #{quantum_neural_net_forward.1} parent=1 // pred_check
      _
    $region19: #{quantum_neural_net_forward.1} parent=1 // pred_check_branch
      %796 = sbr.rel (0) target = $region21
    $region20: #{quantum_neural_net_forward.1} parent=1 // pred_region
      _
    $region21: #{quantum_neural_net_forward.1} parent=1 // pred_fallthru
      _
    // Predicated region
    $region22: #{quantum_neural_net_forward.1} parent=1 // pred_check
      _
    $region23: #{quantum_neural_net_forward.1} parent=1 // pred_check_branch
      %798 = sbr.rel (0) target = $region25
    $region24: #{quantum_neural_net_forward.1} parent=1 // pred_region
      _
    $region25: #{quantum_neural_net_forward.1} parent=1 // pred_fallthru
      _
    %799 = vsyncpa [#allocation3], 1
    %800 = vsyncpa [#allocation4], 1

</llo_original>
